<compile_context>
chip_gen: v7x
topology: tpu7x:2x2x1
jax: 0.10.0
libtpu: 0.0.40
codegen_flags: <defaults>
</compile_context>

<pallas_src>
import functools

import jax
import jax.numpy as jnp
import numpy as np
from jax.experimental import pallas as pl
from jax.experimental.pallas import tpu as pltpu


# ----------------------------- Pallas kernel --------------------------------
def encoder_fused_kernel(obs_ref, c_ref, b_ref, o_ref):
    # obs_ref : (B, obs_len)    f32  batch of EnergyPlus observation vectors
    # c_ref   : (obs_len, N*H)  f32  folded gather-plan ∘ fc-weight matrix
    # b_ref   : (1, N*H)        f32  fc bias, tiled once per zone
    # o_ref   : (B, N*H)        f32  relu(feature @ W^T + b), lane-dense
    y = jnp.dot(obs_ref[...], c_ref[...], preferred_element_type=jnp.float32)
    o_ref[...] = jnp.maximum(y + b_ref[...], 0.0)


def _encoder_pallas_call(obs_bo, c_fold, b_tiled):
    batch, obs_len = obs_bo.shape
    nh = c_fold.shape[1]
    cost = pl.CostEstimate(
        flops=2 * batch * obs_len * nh,
        transcendentals=0,
        bytes_accessed=4 * (batch * obs_len + obs_len * nh + nh + batch * nh),
    )
    return pl.pallas_call(
        encoder_fused_kernel,
        out_shape=jax.ShapeDtypeStruct((batch, nh), jnp.float32),
        in_specs=[
            pl.BlockSpec(memory_space=pltpu.MemorySpace.VMEM),  # obs batch
            pl.BlockSpec(memory_space=pltpu.MemorySpace.VMEM),  # folded C
            pl.BlockSpec(memory_space=pltpu.MemorySpace.VMEM),  # tiled bias
        ],
        out_specs=pl.BlockSpec(memory_space=pltpu.MemorySpace.VMEM),
        cost_estimate=cost,
    )(obs_bo, c_fold, b_tiled)


@jax.jit
def encoder_forward_flat(obs_bo, c_fold, b_tiled):
    """(B, obs_len) f32 -> (B, num_nodes*hidden); zero post-kernel ops."""
    return _encoder_pallas_call(obs_bo, c_fold, b_tiled)


@functools.partial(jax.jit, static_argnames=("num_nodes",))
def encoder_forward_batched(obs_bo, c_fold, b_tiled, *, num_nodes):
    """(B, obs_len) f32 -> (B, num_nodes, hidden); adds one cheap reshape."""
    y_flat = _encoder_pallas_call(obs_bo, c_fold, b_tiled)
    batch, nh = y_flat.shape
    return y_flat.reshape(batch, num_nodes, nh // num_nodes)


# ------------------------- Encoder (JAX version) ----------------------------
class EncoderPallas:
    """JAX/Pallas port of the PyTorch Encoder module."""

    def __init__(self, num_features, hidden_size, handle_to_index,
                 zone_to_variables, zone_index, obs_len, key):
        # `obs_len` (length of eplus_obs_vec) is needed so the gather plan can
        # be folded with the fc weight into a single contraction matrix at
        # init time (the Python dict/list walk of generate_feature_matrix is
        # executed exactly once here, never per forward call).
        self.num_features = num_features
        self.hidden_size = hidden_size
        self.handle_to_index = handle_to_index
        self.zone_to_variables = zone_to_variables
        self.zone_index = zone_index
        self.obs_len = obs_len
        self.num_nodes = len(zone_index)

        # nn.Linear(num_features, hidden_size)-shaped parameters.
        kw, kb = jax.random.split(key)
        bound = 1.0 / np.sqrt(num_features)
        self.weight = jax.random.uniform(
            kw, (hidden_size, num_features), jnp.float32, -bound, bound)
        self.bias = jax.random.uniform(
            kb, (hidden_size,), jnp.float32, -bound, bound)

        # Fold gather plan + fc.weight into one contraction matrix:
        #   C[o, z*H + h] = sum_f [zone z, feature f reads obs[o]] * W[h, f]
        # Missing handles (0) simply contribute nothing; features of the same
        # zone that share an obs index accumulate correctly via +=.
        w_np = np.asarray(self.weight)                              # (H, F)
        nh = self.num_nodes * hidden_size
        c = np.zeros((obs_len, nh), np.float32)
        idx = np.zeros((self.num_nodes, num_features), np.int32)
        mask = np.zeros((self.num_nodes, num_features), np.float32)
        for z, zone_name in enumerate(zone_index):
            for f, handle in enumerate(zone_to_variables[zone_name]):
                if handle != 0:
                    o = handle_to_index[handle]
                    c[o, z * hidden_size:(z + 1) * hidden_size] += w_np[:, f]
                    idx[z, f] = o
                    mask[z, f] = 1.0
        self.c_fold = jnp.asarray(c)                                # (obs_len, N*H)
        self.b_tiled = jnp.asarray(
            np.tile(np.asarray(self.bias), self.num_nodes).reshape(1, nh))
        # Kept only for the pure-JAX reference path (sanity checking).
        self.gather_idx = jnp.asarray(idx)
        self.gather_mask = jnp.asarray(mask)

    # Pure-JAX reference of the original generate_feature_matrix (glue only).
    def generate_feature_matrix(self, eplus_obs_vec):
        gathered = jnp.take(eplus_obs_vec, self.gather_idx, axis=0)
        return (gathered * self.gather_mask).astype(jnp.float32)

    # Batched hot path: caller supplies an f32 (B, obs_len) array (no per-call
    # reshape/astype glue in the jitted path).
    def forward_batched_flat(self, obs_bo):
        return encoder_forward_flat(obs_bo, self.c_fold, self.b_tiled)

    def forward_batched(self, obs_bo):
        return encoder_forward_batched(obs_bo, self.c_fold, self.b_tiled,
                                       num_nodes=self.num_nodes)

    # PyTorch-parity single-observation path: (obs_len,) -> (num_nodes, hidden).
    def forward(self, eplus_obs_vec):
        return self.forward_batched(eplus_obs_vec[None, :])[0]


# --------------------------------- main --------------------------------------
if __name__ == "__main__":
    key = jax.random.PRNGKey(0)
    k_obs, k_params = jax.random.split(key)

    num_zones = 8          # num_nodes
    num_features = 4       # variables per zone
    hidden_size = 32
    obs_len = 16           # length of the EnergyPlus observation vector
    batch = 16             # observation vectors batched per kernel call

    # Deterministic synthetic metadata mirroring the PyTorch module's inputs.
    zone_index = [f"zone_{z}" for z in range(num_zones)]
    # handles are 1..obs_len (0 is the "missing" sentinel); handle h -> obs[h-1]
    handle_to_index = {h: h - 1 for h in range(1, obs_len + 1)}
    zone_to_variables = {}
    for z, zone_name in enumerate(zone_index):
        handles = []
        for f in range(num_features):
            # make some handles 0 to exercise the "missing variable" branch
            if (z + f) % 5 == 0:
                handles.append(0)
            else:
                handles.append(((z * num_features + f) % obs_len) + 1)
        zone_to_variables[zone_name] = handles

    obs_batch = jax.random.normal(k_obs, (batch, obs_len), dtype=jnp.float32)

    enc = EncoderPallas(num_features, hidden_size, handle_to_index,
                        zone_to_variables, zone_index, obs_len, k_params)

    # Batched forward (the optimized path).
    y = jax.block_until_ready(enc.forward_batched(obs_batch))
    y_flat = jax.block_until_ready(enc.forward_batched_flat(obs_batch))

    # Pure-JAX reference (original gather + linear + relu), batched.
    feat_ref = jnp.take(obs_batch, enc.gather_idx, axis=1) * enc.gather_mask  # (B,N,F)
    y_ref = jnp.maximum(
        jnp.einsum("bnf,hf->bnh", feat_ref, enc.weight) + enc.bias, 0.0)
    np.testing.assert_allclose(np.asarray(y), np.asarray(y_ref),
                               rtol=1e-5, atol=1e-5)
    np.testing.assert_allclose(
        np.asarray(y_flat).reshape(batch, num_zones, hidden_size),
        np.asarray(y_ref), rtol=1e-5, atol=1e-5)

    # Single-observation (PyTorch-parity) path.
    y0 = jax.block_until_ready(enc.forward(obs_batch[0]))
    feat0 = enc.generate_feature_matrix(obs_batch[0])
    y0_ref = jnp.maximum(feat0 @ enc.weight.T + enc.bias, 0.0)
    np.testing.assert_allclose(np.asarray(y0), np.asarray(y0_ref),
                               rtol=1e-5, atol=1e-5)

    assert y.shape == (batch, num_zones, hidden_size)
    assert y_flat.shape == (batch, num_zones * hidden_size)
    assert y0.shape == (num_zones, hidden_size)

    print("KERNEL_OK")
</pallas_src>

<mosaic_0001>
module attributes {stable_mosaic.version = 11 : i64} {
  func.func @encoder_fused_kernel(%arg0: memref<16x16xf32, #tpu.memory_space<vmem>>, %arg1: memref<16x256xf32, #tpu.memory_space<vmem>>, %arg2: memref<1x256xf32, #tpu.memory_space<vmem>>, %arg3: memref<16x256xf32, #tpu.memory_space<vmem>>) attributes {dimension_semantics = [], scalar_prefetch = 0 : i64, scratch_operands = 0 : i64, tpu.core_type = #tpu.core_type<tc>} {
    %c0 = arith.constant 0 : index
    %c0_0 = arith.constant 0 : index
    %0 = vector.load %arg0[%c0, %c0_0] : memref<16x16xf32, #tpu.memory_space<vmem>>, vector<16x16xf32>
    %c0_1 = arith.constant 0 : index
    %c0_2 = arith.constant 0 : index
    %1 = vector.load %arg1[%c0_1, %c0_2] : memref<16x256xf32, #tpu.memory_space<vmem>>, vector<16x256xf32>
    %cst = arith.constant dense<0.000000e+00> : vector<16x256xf32>
    %2 = tpu.matmul %0, %1, %cst {dimension_numbers = #tpu.dot_dimension_numbers<[1], [0], [0], [1], [0, 0, 1, 1], [], []>} : vector<16x16xf32>, vector<16x256xf32>, vector<16x256xf32> -> vector<16x256xf32>
    %c0_3 = arith.constant 0 : index
    %c0_4 = arith.constant 0 : index
    %3 = vector.load %arg2[%c0_3, %c0_4] : memref<1x256xf32, #tpu.memory_space<vmem>>, vector<1x256xf32>
    %4 = vector.broadcast %3 : vector<1x256xf32> to vector<16x256xf32>
    %5 = arith.addf %2, %4 : vector<16x256xf32>
    %cst_5 = arith.constant 0.000000e+00 : f32
    %6 = vector.broadcast %cst_5 : f32 to vector<16x256xf32>
    %7 = arith.maximumf %5, %6 : vector<16x256xf32>
    %c0_6 = arith.constant 0 : index
    %c0_7 = arith.constant 0 : index
    %8 = vector.load %arg3[%c0_6, %c0_7] : memref<16x256xf32, #tpu.memory_space<vmem>>, vector<16x256xf32>
    tpu.vector_store %arg3[%c0_6, %c0_7], %7 {strides = array<i32>} : memref<16x256xf32, #tpu.memory_space<vmem>>, vector<16x256xf32>,
    return
  }
}

</mosaic_0001>

<llo_original>
// kernel: encoder_forward_batched.1
$region0: #{encoder_forward_batched.1}
  #allocation0 [shape = 'u32[]', space=smem, size = 0x4, offset = 0x4, fixed_abs, tag = 'smem constant byte address 0x4 - core index']
  #allocation1 [shape = 'u32[144,128]{1,0:T(1,128)}', space=vmem, size = 0x12000, scoped, tag = 'internal scratch']
  %s0 = inlined_call_operand.hbm [shape: f32[16,16], index: 0, kind: input, shape index: {}]
  %s1 = inlined_call_operand.hbm [shape: f32[16,256], index: 1, kind: input, shape index: {}]
  %s2 = inlined_call_operand.vmem [shape: f32[1,256], index: 2, kind: input, shape index: {}]
  %s3 = inlined_call_operand.vmem [shape: f32[16,256], index: 3, kind: output, shape index: {}]
  %s4 = sld [smem:[#allocation0]]
  $region30: #{encoder_forward_batched.1} parent=0
    _
  %s6 = ssub.s32 1, %s4
  %s7 = scalar_select 0, %s6, %s4
  $region1: #{encoder_forward_batched.1} parent=0
    #allocation2 [shape = 'u8[8192]{0}', space=vmem, size = 0x2000, scoped, tag = 'input window, operand 0, single buffered']
    #allocation3 [shape = 's32[1]{0}', space=sflag, size = 0x4, scoped, tag = 'scoped memory for encoder_forward_batched.1']
    #allocation4 [shape = 'u8[16384]{0}', space=vmem, size = 0x4000, scoped, tag = 'input window, operand 1, single buffered']
    #allocation5 [shape = 's32[1]{0}', space=sflag, size = 0x4, scoped, tag = 'scoped memory for encoder_forward_batched.1']
    %8 = vsyncpa [#allocation3], 0
    %9 = vsyncpa [#allocation5], 0
    // Predicated region
    $region2: #{encoder_forward_batched.1} parent=1 // pred_check
      _
    $region3: #{encoder_forward_batched.1} parent=1 // pred_check_branch
      %11 = sbr.rel (0) target = $region5
    $region4: #{encoder_forward_batched.1} parent=1 // pred_region
      %s13 = ssub.s32 256, 256
      %14 = vsyncadd [#allocation3], %s13
      %s15 = sshll.u32 [#allocation2], 4
      %s16 = int_to_ptr.vmem [resolvable:$true] %s15
      %21 = dma.hbm_to_vmem [thread:$0]  %s0, 256, %s16, [#allocation3], 128, 128, 8
    $region5: #{encoder_forward_batched.1} parent=1 // pred_fallthru
      _
    // Predicated region
    $region6: #{encoder_forward_batched.1} parent=1 // pred_check
      _
    $region7: #{encoder_forward_batched.1} parent=1 // pred_check_branch
      %23 = sbr.rel (0) target = $region9
    $region8: #{encoder_forward_batched.1} parent=1 // pred_region
      %s25 = ssub.s32 512, 512
      %26 = vsyncadd [#allocation5], %s25
      %s27 = sshll.u32 [#allocation4], 4
      %s28 = int_to_ptr.vmem [resolvable:$true] %s27
      %33 = dma.hbm_to_vmem [thread:$0]  %s1, 512, %s28, [#allocation5], 256, 256, 16
    $region9: #{encoder_forward_batched.1} parent=1 // pred_fallthru
      _
    // Predicated region
    $region10: #{encoder_forward_batched.1} parent=1 // pred_check
      _
    $region11: #{encoder_forward_batched.1} parent=1 // pred_check_branch
      %35 = sbr.rel (0) target = $region13
    $region12: #{encoder_forward_batched.1} parent=1 // pred_region
      _
    $region13: #{encoder_forward_batched.1} parent=1 // pred_fallthru
      _
    // Predicated region
    $region14: #{encoder_forward_batched.1} parent=1 // pred_check
      _
    $region15: #{encoder_forward_batched.1} parent=1 // pred_check_branch
      %37 = sbr.rel (0) target = $region17
    $region16: #{encoder_forward_batched.1} parent=1 // pred_region
      %38 = dma.done [#allocation3], 256
    $region17: #{encoder_forward_batched.1} parent=1 // pred_fallthru
      _
    // Predicated region
    $region18: #{encoder_forward_batched.1} parent=1 // pred_check
      _
    $region19: #{encoder_forward_batched.1} parent=1 // pred_check_branch
      %40 = sbr.rel (0) target = $region21
    $region20: #{encoder_forward_batched.1} parent=1 // pred_region
      %41 = dma.done [#allocation5], 512
    $region21: #{encoder_forward_batched.1} parent=1 // pred_fallthru
      _
    %v42 = vld [vmem:[#allocation2] sm:$0xff]
    %v43 = vld [vmem:[#allocation2 + $0x8] sm:$0xff]
    %v44 = vld [vmem:[#allocation4] sm:$0xff]
    %v45 = vld [vmem:[#allocation4 + $0x8] sm:$0xff]
    %v46 = vld [vmem:[#allocation4 + $0x10] sm:$0xff]
    %v47 = vld [vmem:[#allocation4 + $0x18] sm:$0xff]
    %v48 = vld [vmem:[%s2] sm:$0x3]
    %v50 = vlaneseq
    %v51 = vshrl.u32 %v50, 7
    %v52 = vsub.s32 0, %v51
    %v53 = vrot.slane %v48, %v52
    %v54 = vlaneseq
    %v55 = vshrl.u32 %v54, 7
    %v56 = vsub.s32 1, %v55
    %v57 = vrot.slane %v48, %v56
    %vm60 = vcmask 130048
    %v62 = vsel %vm60, %v42, 0
    %v65 = vsel %vm60, %v43, 0
    %67 = vmatprep.subr.mxu0 %v45
    %68 = vmatpush1.msra.mxu0 %v44
    %69 = vmatprep.subr.mxu0 %v47
    %70 = vmatpush1.msra.mxu0 %v46
    %71 = vmatprep.subr.mxu0 0.0
    %72 = vmatpush1.msra.mxu0 0.0
    %73 = vmatprep.subr.mxu0 0.0
    %74 = vmatpush1.msra.mxu0 0.0
    %75 = vmatprep.subr.mxu0 0.0
    %76 = vmatpush1.msra.mxu0 0.0
    %77 = vmatprep.subr.mxu0 0.0
    %78 = vmatpush1.msra.mxu0 0.0
    %79 = vmatprep.subr.mxu0 0.0
    %80 = vmatpush1.msra.mxu0 0.0
    %81 = vmatprep.subr.mxu0 0.0
    %82 = vmatpush1.msra.mxu0 0.0
    %83 = vmatprep.subr.mxu0 0.0
    %84 = vmatpush1.msra.mxu0 0.0
    %85 = vmatprep.subr.mxu0 0.0
    %86 = vmatpush1.msra.mxu0 0.0
    %87 = vmatprep.subr.mxu0 0.0
    %88 = vmatpush1.msra.mxu0 0.0
    %89 = vmatprep.subr.mxu0 0.0
    %90 = vmatpush1.msra.mxu0 0.0
    %91 = vmatprep.subr.mxu0 0.0
    %92 = vmatpush1.msra.mxu0 0.0
    %93 = vmatprep.subr.mxu0 0.0
    %94 = vmatpush1.msra.mxu0 0.0
    %95 = vmatprep.subr.mxu0 0.0
    %96 = vmatpush1.msra.mxu0 0.0
    %97 = vmatprep.subr.mxu0 0.0
    %98 = vmatpush1.msra.mxu0 0.0
    %99 = vmatprep.subr.mxu0 0.0
    %100 = vmatpush1.msra.mxu0 0.0
    %101 = vmatprep.subr.mxu0 0.0
    %102 = vmatpush1.msra.mxu0 0.0
    %103 = vmatprep.subr.mxu0 0.0
    %104 = vmatpush1.msra.mxu0 0.0
    %105 = vmatprep.subr.mxu0 0.0
    %106 = vmatpush1.msra.mxu0 0.0
    %107 = vmatprep.subr.mxu0 0.0
    %108 = vmatpush1.msra.mxu0 0.0
    %109 = vmatprep.subr.mxu0 0.0
    %110 = vmatpush1.msra.mxu0 0.0
    %111 = vmatprep.subr.mxu0 0.0
    %112 = vmatpush1.msra.mxu0 0.0
    %113 = vmatprep.subr.mxu0 0.0
    %114 = vmatpush1.msra.mxu0 0.0
    %115 = vmatprep.subr.mxu0 0.0
    %116 = vmatpush1.msra.mxu0 0.0
    %117 = vmatprep.subr.mxu0 0.0
    %118 = vmatpush1.msra.mxu0 0.0
    %119 = vmatprep.subr.mxu0 0.0
    %120 = vmatpush1.msra.mxu0 0.0
    %121 = vmatprep.subr.mxu0 0.0
    %122 = vmatpush1.msra.mxu0 0.0
    %123 = vmatprep.subr.mxu0 0.0
    %124 = vmatpush1.msra.mxu0 0.0
    %125 = vmatprep.subr.mxu0 0.0
    %126 = vmatpush1.msra.mxu0 0.0
    %127 = vmatprep.subr.mxu0 0.0
    %128 = vmatpush1.msra.mxu0 0.0
    %129 = vmatprep.subr.mxu0 0.0
    %130 = vmatpush1.msra.mxu0 0.0
    %131 = vmatprep.mubr.f32.mxu0 0.0
    %132 = vmatmul.mubr.f32.gmra.mrb[0].mxu0 %v62
    %v133 = vpop.f32.mrb[0].mxu0
    %v134 = vadd.f32 %v53, %v133
    %v135 = vpop.f32.mrb[0].mxu0
    %v136 = vadd.f32 %v57, %v135
    %137 = vmatprep.mubr.f32.mxu0 0.0
    %138 = vmatmul.mubr.f32.gmra.mrb[0].mxu0 %v65
    %v139 = vpop.f32.mrb[0].mxu0
    %v140 = vadd.f32 %v53, %v139
    %v141 = vpop.f32.mrb[0].mxu0
    %v142 = vadd.f32 %v57, %v141
    %143 = vdwg.mxu0
    %v144 = vmax.f32 %v134, 0.0
    %v145 = vmax.f32 %v136, 0.0
    %v146 = vmax.f32 %v140, 0.0
    %v147 = vmax.f32 %v142, 0.0
    %148 = vst [vmem:[%s3] sm:$0xff] %v144
    %149 = vst [vmem:[%s3 + $0x8] sm:$0xff] %v145
    %150 = vst [vmem:[%s3 + $0x10] sm:$0xff] %v146
    %151 = vst [vmem:[%s3 + $0x18] sm:$0xff] %v147
    // Predicated region
    $region22: #{encoder_forward_batched.1} parent=1 // pred_check
      _
    $region23: #{encoder_forward_batched.1} parent=1 // pred_check_branch
      %153 = sbr.rel (0) target = $region25
    $region24: #{encoder_forward_batched.1} parent=1 // pred_region
      _
    $region25: #{encoder_forward_batched.1} parent=1 // pred_fallthru
      _
    // Predicated region
    $region26: #{encoder_forward_batched.1} parent=1 // pred_check
      _
    $region27: #{encoder_forward_batched.1} parent=1 // pred_check_branch
      %155 = sbr.rel (0) target = $region29
    $region28: #{encoder_forward_batched.1} parent=1 // pred_region
      _
    $region29: #{encoder_forward_batched.1} parent=1 // pred_fallthru
      _
    %156 = vsyncpa [#allocation3], 1
    %157 = vsyncpa [#allocation5], 1

</llo_original>
